<compile_context>
chip_gen: v6e
topology: v6e:2x2x1
jax: 0.10.0
libtpu: 0.0.40
codegen_flags: <defaults>
</compile_context>

<pallas_src>
import jax
import jax.numpy as jnp
from jax.experimental import pallas as pl
from jax.experimental.pallas import tpu as pltpu


# ---------------------------------------------------------------------------
# Shared softmax (rows = batch, softmax over the lane/S axis), f32 math.
# ---------------------------------------------------------------------------
def _softmax_rows_f32(score):
    # score: (TB, S) f32
    m = jnp.max(score, axis=-1, keepdims=True)
    e = jnp.exp(score - m)
    denom = jnp.sum(e, axis=-1, keepdims=True)
    # approx=True would move the divide onto the EUP slot but costs ~1e-4 rel
    # error; keep the exact reciprocal so the 1e-5 reference check holds.
    return e * pl.reciprocal(denom, approx=False)


# ---------------------------------------------------------------------------
# Kernels (one batch tile per grid step; score + softmax fused in-kernel)
# ---------------------------------------------------------------------------
def dot_kernel(h_ref, e_ref, o_ref):
    h32 = h_ref[...].astype(jnp.float32)                     # (TB, H) tiny cast
    # f32 product via type promotion (no explicit f32 copy of the enc tile).
    score = jnp.sum(h32[:, None, :] * e_ref[...], axis=-1)   # (TB, S)
    o_ref[...] = _softmax_rows_f32(score).astype(o_ref.dtype)


def general_kernel(h_ref, e_ref, w_ref, b_ref, o_ref):
    # nn.Linear: energy = enc @ W.T + b ; score_s = sum_k h_k * energy_{s,k}
    #          = sum_j enc_{s,j} * (h @ W)_j  +  h . b
    h32 = h_ref[...].astype(jnp.float32)                     # (TB, H)
    g = jnp.dot(h32, w_ref[...], preferred_element_type=jnp.float32)  # (TB, H)
    c = jnp.sum(h32 * b_ref[...], axis=-1, keepdims=True)    # (TB, 1) exact logit offset
    score = jnp.sum(g[:, None, :] * e_ref[...], axis=-1) + c  # (TB, S)
    o_ref[...] = _softmax_rows_f32(score).astype(o_ref.dtype)


def concat_kernel(h_ref, e_ref, w1t_ref, w2t_ref, b_ref, v_ref, o_ref):
    # Wa(cat(h_expanded, enc)) == h @ W1.T + enc @ W2.T + b, with
    # W1 = Wa[:, :H], W2 = Wa[:, H:].  W1T/W2T are pre-transposed in the
    # wrapper so both matmuls are plain row-major MXU contractions.
    h = h_ref[...]                                           # (TB, H)
    enc = e_ref[...]                                         # (TB, S, H)
    t1 = jnp.dot(h, w1t_ref[...],
                 preferred_element_type=jnp.float32) + b_ref[...]      # (TB, H)
    t2 = jnp.einsum("bsh,hk->bsk", enc, w2t_ref[...],
                    preferred_element_type=jnp.float32)                # (TB, S, H)
    energy = jnp.tanh(t1[:, None, :] + t2)                             # (TB, S, H)
    score = jnp.sum(v_ref[...] * energy, axis=-1)                      # (TB, S)
    o_ref[...] = _softmax_rows_f32(score).astype(o_ref.dtype)


# ---------------------------------------------------------------------------
# Wrapper: parameter setup + pallas_call plumbing (grid over batch)
# ---------------------------------------------------------------------------
def _pick_batch_tile(B, S, H, bytes_per_elem=4, budget=16 * 1024 * 1024):
    """Largest batch tile that (a) divides B, (b) satisfies the (8,128) rule on
    the sublane dim (multiple of 8 or == B), (c) keeps ~4x the enc tile
    (double-buffered input + f32 intermediates) under a conservative VMEM
    budget that also fits v7x's smaller 64 MiB VMEM."""
    max_rows = max(1, budget // (4 * S * H * bytes_per_elem))
    if B % 8 == 0:
        tb = 8
        while tb * 2 <= min(B, max_rows, 1024) and B % (tb * 2) == 0:
            tb *= 2
        return tb
    return B  # small / odd batch: single block (block dim == full array dim)


class LuongAttentionPallas:
    def __init__(self, method, hidden_size, key):
        if method not in ["dot", "general", "concat"]:
            raise ValueError(method, "is not an appropriate attention method.")
        self.method = method
        self.hidden_size = hidden_size
        H = hidden_size

        # Deterministic parameter init (mimics nn.Linear's U(-1/sqrt(fan_in))).
        if method == "general":
            k1, k2 = jax.random.split(key, 2)
            bound = 1.0 / (H ** 0.5)
            self.W = jax.random.uniform(k1, (H, H), jnp.float32, -bound, bound)
            self.b = jax.random.uniform(k2, (1, H), jnp.float32, -bound, bound)
        elif method == "concat":
            k1, k2, k3 = jax.random.split(key, 3)
            bound = 1.0 / ((2 * H) ** 0.5)
            self.Wa = jax.random.uniform(k1, (H, 2 * H), jnp.float32, -bound, bound)
            self.b = jax.random.uniform(k2, (1, H), jnp.float32, -bound, bound)
            self.v = jax.random.uniform(k3, (1, H), jnp.float32, -1.0, 1.0)
            # Pre-transpose once so kernels do plain row-major matmuls.
            self.W1T = jnp.asarray(self.Wa[:, :H].T)   # (H, H), acts on hidden
            self.W2T = jnp.asarray(self.Wa[:, H:].T)   # (H, H), acts on encoder out

    def __call__(self, hidden, encoder_output):
        B, S, H = encoder_output.shape
        assert hidden.shape == (B, 1, H)
        h2d = hidden.reshape(B, H)                       # drop size-1 query dim

        TB = _pick_batch_tile(B, S, H)
        grid = (pl.cdiv(B, TB),)

        h_spec = pl.BlockSpec((TB, H), lambda i: (i, 0))
        e_spec = pl.BlockSpec((TB, S, H), lambda i: (i, 0, 0))
        o_spec = pl.BlockSpec((TB, S), lambda i: (i, 0))
        # Weights / bias / v stay VMEM-resident across the batch grid.
        p_spec = lambda shape: pl.BlockSpec(shape, lambda i: (0, 0))

        out_shape = jax.ShapeDtypeStruct((B, S), jnp.float32)
        cparams = pltpu.CompilerParams(dimension_semantics=("parallel",))

        # NOTE: for very long S one would additionally tile S (online-softmax
        # accumulator pattern); at typical decoder-step S the row fits in VMEM.
        if self.method == "dot":
            out = pl.pallas_call(
                dot_kernel,
                out_shape=out_shape,
                grid_spec=pltpu.PrefetchScalarGridSpec(
                    num_scalar_prefetch=0, grid=grid,
                    in_specs=[h_spec, e_spec], out_specs=o_spec),
                compiler_params=cparams,
            )(h2d, encoder_output)
        elif self.method == "general":
            out = pl.pallas_call(
                general_kernel,
                out_shape=out_shape,
                grid_spec=pltpu.PrefetchScalarGridSpec(
                    num_scalar_prefetch=0, grid=grid,
                    in_specs=[h_spec, e_spec, p_spec((H, H)), p_spec((1, H))],
                    out_specs=o_spec),
                compiler_params=cparams,
            )(h2d, encoder_output, self.W, self.b)
        else:  # concat
            out = pl.pallas_call(
                concat_kernel,
                out_shape=out_shape,
                grid_spec=pltpu.PrefetchScalarGridSpec(
                    num_scalar_prefetch=0, grid=grid,
                    in_specs=[h_spec, e_spec, p_spec((H, H)), p_spec((H, H)),
                              p_spec((1, H)), p_spec((1, H))],
                    out_specs=o_spec),
                compiler_params=cparams,
            )(h2d, encoder_output, self.W1T, self.W2T, self.b, self.v)

        return out[:, None, :]                           # (B, 1, S)


# ---------------------------------------------------------------------------
# Pure-JAX reference for verification (mirrors the PyTorch module exactly)
# ---------------------------------------------------------------------------
def reference(attn, hidden, encoder_output):
    if attn.method == "dot":
        score = jnp.sum(hidden * encoder_output, axis=2)
    elif attn.method == "general":
        energy = encoder_output @ attn.W.T + attn.b
        score = jnp.sum(hidden * energy, axis=2)
    else:  # concat
        B, S, H = encoder_output.shape
        h_exp = jnp.broadcast_to(hidden, (B, S, H))
        cat = jnp.concatenate([h_exp, encoder_output], axis=2)
        energy = jnp.tanh(cat @ attn.Wa.T + attn.b)
        score = jnp.sum(attn.v * energy, axis=2)
    return jax.nn.softmax(score, axis=1)[:, None, :]


def _run_case(B, S, H, key):
    k_h, k_e, k_p = jax.random.split(key, 3)
    hidden = jax.random.normal(k_h, (B, 1, H), jnp.float32)
    encoder_output = jax.random.normal(k_e, (B, S, H), jnp.float32)
    for method in ["dot", "general", "concat"]:
        attn = LuongAttentionPallas(method, H, k_p)
        out = jax.block_until_ready(attn(hidden, encoder_output))
        ref = reference(attn, hidden, encoder_output)
        assert out.shape == (B, 1, S), (method, out.shape)
        err = float(jnp.max(jnp.abs(out - ref)))
        assert jnp.allclose(out, ref, atol=1e-5, rtol=1e-5), (method, B, S, H, err)
        assert jnp.allclose(jnp.sum(out, axis=2), 1.0, atol=1e-5), (method, "rows != 1")


if __name__ == "__main__":
    key = jax.random.PRNGKey(0)
    k1, k2 = jax.random.split(key, 2)
    # Spec-sized case (single batch tile).
    _run_case(B=2, S=8, H=32, key=k1)
    # Larger batch to exercise a multi-step batch grid (TB=8 -> 3 grid steps).
    _run_case(B=24, S=8, H=32, key=k2)
    print("KERNEL_OK")
</pallas_src>

<mosaic_0001>
module attributes {stable_mosaic.version = 11 : i64} {
  func.func @dot_kernel(%arg0: i32, %arg1: memref<2x32xf32, #tpu.memory_space<vmem>>, %arg2: memref<2x8x32xf32, #tpu.memory_space<vmem>>, %arg3: memref<2x8xf32, #tpu.memory_space<vmem>>) attributes {dimension_semantics = [#tpu.dimension_semantics<parallel>], iteration_bounds = array<i64: 1>, scalar_prefetch = 0 : i64, scratch_operands = 0 : i64, tpu.core_type = #tpu.core_type<tc>, window_params = [{transform_indices = @transform_0, window_bounds = array<i64: 2, 32>}, {transform_indices = @transform_1, window_bounds = array<i64: 2, 8, 32>}, {transform_indices = @transform_2, window_bounds = array<i64: 2, 8>}]} {
    %c0 = arith.constant 0 : index
    %c0_0 = arith.constant 0 : index
    %0 = vector.load %arg1[%c0, %c0_0] : memref<2x32xf32, #tpu.memory_space<vmem>>, vector<2x32xf32>
    %1 = vector.shape_cast %0 : vector<2x32xf32> to vector<2x1x32xf32>
    %c0_1 = arith.constant 0 : index
    %c0_2 = arith.constant 0 : index
    %c0_3 = arith.constant 0 : index
    %2 = vector.load %arg2[%c0_1, %c0_2, %c0_3] : memref<2x8x32xf32, #tpu.memory_space<vmem>>, vector<2x8x32xf32>
    %3 = vector.broadcast %1 : vector<2x1x32xf32> to vector<2x8x32xf32>
    %4 = arith.mulf %3, %2 : vector<2x8x32xf32>
    %cst = arith.constant dense<0.000000e+00> : vector<2x8xf32>
    %5 = vector.multi_reduction <add>, %4, %cst [2] : vector<2x8x32xf32> to vector<2x8xf32>
    %cst_4 = arith.constant dense<0xFF800000> : vector<2xf32>
    %6 = vector.multi_reduction <maximumf>, %5, %cst_4 [1] : vector<2x8xf32> to vector<2xf32>
    %7 = vector.shape_cast %6 : vector<2xf32> to vector<2x1xf32>
    %8 = vector.broadcast %7 : vector<2x1xf32> to vector<2x8xf32>
    %9 = arith.subf %5, %8 : vector<2x8xf32>
    %10 = math.exp %9 : vector<2x8xf32>
    %cst_5 = arith.constant dense<0.000000e+00> : vector<2xf32>
    %11 = vector.multi_reduction <add>, %10, %cst_5 [1] : vector<2x8xf32> to vector<2xf32>
    %12 = vector.shape_cast %11 : vector<2xf32> to vector<2x1xf32>
    %13 = tpu.reciprocal %12 : vector<2x1xf32> -> vector<2x1xf32>
    %14 = vector.broadcast %13 : vector<2x1xf32> to vector<2x8xf32>
    %15 = arith.mulf %10, %14 : vector<2x8xf32>
    %c0_6 = arith.constant 0 : index
    %c0_7 = arith.constant 0 : index
    %16 = vector.load %arg3[%c0_6, %c0_7] : memref<2x8xf32, #tpu.memory_space<vmem>>, vector<2x8xf32>
    tpu.vector_store %arg3[%c0_6, %c0_7], %15 {strides = array<i32>} : memref<2x8xf32, #tpu.memory_space<vmem>>, vector<2x8xf32>,
    return
  }
  func.func @transform_0(%arg0: i32) -> (i32, i32) {
    %c0_i32 = arith.constant 0 : i32
    %c0_i32_0 = arith.constant 0 : i32
    return %arg0, %c0_i32 : i32, i32
  }
  func.func @transform_1(%arg0: i32) -> (i32, i32, i32) {
    %c0_i32 = arith.constant 0 : i32
    %c0_i32_0 = arith.constant 0 : i32
    %c0_i32_1 = arith.constant 0 : i32
    return %arg0, %c0_i32, %c0_i32_0 : i32, i32, i32
  }
  func.func @transform_2(%arg0: i32) -> (i32, i32) {
    %c0_i32 = arith.constant 0 : i32
    %c0_i32_0 = arith.constant 0 : i32
    return %arg0, %c0_i32 : i32, i32
  }
}

</mosaic_0001>

<llo_original>
// kernel: tpu_custom_call.1
$region0: #{tpu_custom_call.1}
  #allocation0 [shape = 'u32[]', space=smem, size = 0x4, offset = 0x4, fixed_abs, tag = 'smem constant byte address 0x4 - core index']
  #allocation1 [shape = 'u32[144,128]{1,0:T(1,128)}', space=vmem, size = 0x12000, scoped, tag = 'internal scratch']
  %s0 = inlined_call_operand.hbm [shape: f32[2,32], index: 0, kind: input, shape index: {}]
  %s1 = inlined_call_operand.hbm [shape: f32[2,8,32], index: 1, kind: input, shape index: {}]
  %s2 = inlined_call_operand.hbm [shape: f32[2,8], index: 2, kind: output, shape index: {}]
  %s3 = sld [smem:[#allocation0]]
  $region26: #{tpu_custom_call.1} parent=0
    _
  %s5 = ssub.s32 1, %s3
  %s6 = scalar_select 0, %s5, %s3
  $region1: #{tpu_custom_call.1} parent=0
    #allocation2 [shape = 'u8[1024]{0}', space=vmem, size = 0x400, scoped, tag = 'input window, operand 0, single buffered']
    #allocation3 [shape = 's32[1]{0}', space=sflag, size = 0x4, scoped, tag = 'scoped memory for tpu_custom_call.1']
    #allocation4 [shape = 's32[1]{0}', space=sflag, size = 0x4, scoped, tag = 'scoped memory for tpu_custom_call.1']
    #allocation5 [shape = 'u8[8192]{0}', space=vmem, size = 0x2000, scoped, tag = 'input window, operand 1, single buffered']
    #allocation6 [shape = 's32[1]{0}', space=sflag, size = 0x4, scoped, tag = 'scoped memory for tpu_custom_call.1']
    #allocation7 [shape = 'u8[1024]{0}', space=vmem, size = 0x400, scoped, tag = 'output window, operand 0, single buffered']
    %7 = vsyncpa [#allocation3], 0
    %8 = vsyncpa [#allocation6], 0
    %9 = vsyncpa [#allocation4], 0
    // Predicated region
    $region2: #{tpu_custom_call.1} parent=1 // pred_check
      _
    $region3: #{tpu_custom_call.1} parent=1 // pred_check_branch
      %11 = sbr.rel (0) target = $region5
    $region4: #{tpu_custom_call.1} parent=1 // pred_region
      %s13 = ssub.s32 32, 32
      %14 = vsyncadd [#allocation3], %s13
      %s16 = sshll.u32 [#allocation2], 4
      %s17 = int_to_ptr.vmem [resolvable:$true] %s16
      %19 = dma.hbm_to_vmem [thread:$0]  %s0, 32, %s17, [#allocation3]
    $region5: #{tpu_custom_call.1} parent=1 // pred_fallthru
      _
    // Predicated region
    $region6: #{tpu_custom_call.1} parent=1 // pred_check
      _
    $region7: #{tpu_custom_call.1} parent=1 // pred_check_branch
      %21 = sbr.rel (0) target = $region9
    $region8: #{tpu_custom_call.1} parent=1 // pred_region
      %s23 = ssub.s32 256, 256
      %24 = vsyncadd [#allocation6], %s23
      %s25 = sshll.u32 [#allocation5], 4
      %s26 = int_to_ptr.vmem [resolvable:$true] %s25
      %31 = dma.hbm_to_vmem [thread:$0]  %s1, 256, %s26, [#allocation6], 128, 128, 8
    $region9: #{tpu_custom_call.1} parent=1 // pred_fallthru
      _
    // Predicated region
    $region10: #{tpu_custom_call.1} parent=1 // pred_check
      _
    $region11: #{tpu_custom_call.1} parent=1 // pred_check_branch
      %33 = sbr.rel (0) target = $region13
    $region12: #{tpu_custom_call.1} parent=1 // pred_region
      %34 = dma.done [#allocation3], 32
    $region13: #{tpu_custom_call.1} parent=1 // pred_fallthru
      _
    // Predicated region
    $region14: #{tpu_custom_call.1} parent=1 // pred_check
      _
    $region15: #{tpu_custom_call.1} parent=1 // pred_check_branch
      %36 = sbr.rel (0) target = $region17
    $region16: #{tpu_custom_call.1} parent=1 // pred_region
      %37 = dma.done [#allocation6], 256
    $region17: #{tpu_custom_call.1} parent=1 // pred_fallthru
      _
    %v38 = vld [vmem:[#allocation2] sm:$0x3]
    %v41 = vunpack.c.l.s4 1966171168
    %v42 = vunpack.c.0.s8 %v41
    %v43 = vlaneseq
    %v44 = vshrl.u32 %v43, 7
    %v45 = vsub.s32 %v42, %v44
    %v46 = vrot.slane %v38, %v45
    %v47 = vcombine.high %v46, %v46
    %v49 = vunpack.c.l.s4 1966171168
    %v50 = vunpack.c.0.s8 %v49
    %v51 = vlaneseq
    %v52 = vshrl.u32 %v51, 7
    %v53 = vsub.s32 %v50, %v52
    %v54 = vrot.slane %v46, %v53
    %v56 = vunpack.c.l.s4 1966171168
    %v57 = vunpack.c.0.s8 %v56
    %v58 = vlaneseq
    %v59 = vshrl.u32 %v58, 7
    %v60 = vsub.s32 %v57, %v59
    %v61 = vrot.slane %v47, %v60
    %v62 = vld [vmem:[#allocation5] sm:$0xff]
    %v63 = vld [vmem:[#allocation5 + $0x8] sm:$0xff]
    %v64 = vlaneseq
    %v65 = vshrl.u32 %v64, 7
    %v66 = vsub.s32 0, %v65
    %v67 = vrot.slane %v54, %v66
    %v68 = vlaneseq
    %v69 = vshrl.u32 %v68, 7
    %v70 = vsub.s32 0, %v69
    %v71 = vrot.slane %v61, %v70
    %v74 = vmul.f32 %v67, %v62
    %v75 = vmul.f32 %v71, %v63
    %vm76 = vcmask 261120
    %v77 = vsel %vm76, %v74, 0.0
    %78 = vadd.xlane.f32.xlu0 %v77
    %v79 = vpop.xlane.xlu0 %78
    %v80 = vsel %vm76, %v75, 0.0
    %81 = vadd.xlane.f32.xlu0 %v80
    %v82 = vpop.xlane.xlu0 %81
    %v85 = vlaneseq
    %v86 = vand.u32 %v85, 127
    %v87 = vlaneseq
    %v88 = vshrl.u32 %v87, 7
    %v89 = vsub.s32 %v86, %v88
    %v90 = vrot.slane %v79, %v89
    %v91 = vlaneseq
    %v92 = vshrl.u32 %v91, 7
    %v93 = vsub.s32 %v86, %v92
    %v94 = vrot.slane %v82, %v93
    %vm95 = vcmask 1041409
    %v96 = vsel %vm95, %v94, %v90
    %vm98 = vcmask 58368
    %v99 = vsel %vm98, %v96, -inf
    %100 = vmax.xlane.f32.xlu0 %v99
    %v101 = vpop.xlane.xlu0 %100
    %v103 = vlaneseq
    %v104 = vshrl.u32 %v103, 7
    %v105 = vsub.s32 0, %v104
    %v106 = vrot.slane %v101, %v105
    %v107 = vlaneseq
    %v108 = vshrl.u32 %v107, 7
    %v109 = vsub.s32 1, %v108
    %v110 = vrot.slane %v101, %v109
    %v113 = vsub.f32 %v79, %v106
    %v114 = vsub.f32 %v82, %v110
    %v115 = vmul.f32 %v113, 1.442695
    %v116 = vpow.pop %v115
    %v117 = vmul.f32 %v114, 1.442695
    %v118 = vpow.pop %v117
    %121 = vset.pattern.permute.xlu0 0
    %122 = vperm.xlu0 %121, %v116
    %v123 = vpop.permute.xlu0 %122
    %124 = vset.pattern.permute.xlu0 0
    %125 = vperm.xlu0 %124, %v118
    %v126 = vpop.permute.xlu0 %125
    %v127 = vlaneseq
    %v128 = vshrl.u32 %v127, 7
    %v129 = vsub.s32 %v86, %v128
    %v130 = vrot.slane %v123, %v129
    %v131 = vlaneseq
    %v132 = vshrl.u32 %v131, 7
    %v133 = vsub.s32 %v86, %v132
    %v134 = vrot.slane %v126, %v133
    %v135 = vsel %vm95, %v134, %v130
    %v137 = vsel %vm98, %v135, 0.0
    %138 = vadd.xlane.f32.xlu0 %v137
    %v139 = vpop.xlane.xlu0 %138
    %v140 = vrcp.pop %v139
    %v142 = vlaneseq
    %v143 = vshrl.u32 %v142, 7
    %v144 = vsub.s32 0, %v143
    %v145 = vrot.slane %v140, %v144
    %v146 = vlaneseq
    %v147 = vshrl.u32 %v146, 7
    %v148 = vsub.s32 1, %v147
    %v149 = vrot.slane %v140, %v148
    %v152 = vmul.f32 %v116, %v145
    %v153 = vmul.f32 %v118, %v149
    %156 = vset.pattern.permute.xlu0 0
    %157 = vperm.xlu0 %156, %v152
    %v158 = vpop.permute.xlu0 %157
    %159 = vset.pattern.permute.xlu0 0
    %160 = vperm.xlu0 %159, %v153
    %v161 = vpop.permute.xlu0 %160
    %v162 = vlaneseq
    %v163 = vshrl.u32 %v162, 7
    %v164 = vsub.s32 %v86, %v163
    %v165 = vrot.slane %v158, %v164
    %v166 = vlaneseq
    %v167 = vshrl.u32 %v166, 7
    %v168 = vsub.s32 %v86, %v167
    %v169 = vrot.slane %v161, %v168
    %v170 = vsel %vm95, %v169, %v165
    %172 = vst.msk [vmem:[#allocation7] sm:$0x3] %vm98, %v170
    // Predicated region
    $region18: #{tpu_custom_call.1} parent=1 // pred_check
      _
    $region19: #{tpu_custom_call.1} parent=1 // pred_check_branch
      %174 = sbr.rel (0) target = $region21
    $region20: #{tpu_custom_call.1} parent=1 // pred_region
      %s176 = ssub.s32 32, 32
      %177 = vsyncadd [#allocation4], %s176
      %s179 = sshll.u32 [#allocation7], 4
      %s180 = int_to_ptr.vmem [resolvable:$true] %s179
      %182 = dma.vmem_to_hbm [thread:$0]  %s180, 32, %s2, [#allocation4]
    $region21: #{tpu_custom_call.1} parent=1 // pred_fallthru
      _
    // Predicated region
    $region22: #{tpu_custom_call.1} parent=1 // pred_check
      _
    $region23: #{tpu_custom_call.1} parent=1 // pred_check_branch
      %184 = sbr.rel (0) target = $region25
    $region24: #{tpu_custom_call.1} parent=1 // pred_region
      %185 = dma.done [#allocation4], 32
    $region25: #{tpu_custom_call.1} parent=1 // pred_fallthru
      _
    %186 = vsyncpa [#allocation3], 1
    %187 = vsyncpa [#allocation6], 1
    %188 = vsyncpa [#allocation4], 1

</llo_original>
